<compile_context>
chip_gen: v7x
topology: tpu7x:2x2x1
jax: 0.10.0
libtpu: 0.0.40
codegen_flags: <defaults>
</compile_context>

<pallas_src>
import functools

import jax
import jax.numpy as jnp
from jax.experimental import pallas as pl
from jax.experimental.pallas import tpu as pltpu

LANE = 128
SUBLANE = 8


def _round_up(x, m):
    return ((x + m - 1) // m) * m


# ----------------------------------------------------------------------------- kernel
def policy_net_kernel(params_ref, x_ref, o_ref, *, s_pad, n_hiddens, n_actions):
    # Packed 128-lane slab layout (zero padding outside live regions):
    #   rows 0:H      cols 0:s_pad  -> W1 (H, S)  (+ zero cols up to s_pad)
    #   rows 0:H      col  s_pad    -> b1 (H,)
    #   rows H:H+A    cols 0:H      -> W2 (A, H)
    #   rows H:H+A    col  H        -> b2 (A,)
    w1 = params_ref[0:n_hiddens, 0:s_pad]                                       # (H, S_pad)
    b1 = params_ref[0:n_hiddens, s_pad:s_pad + 1]                               # (H, 1)
    w2 = params_ref[n_hiddens:n_hiddens + n_actions, 0:n_hiddens]               # (A, H)
    b2 = params_ref[n_hiddens:n_hiddens + n_actions, n_hiddens:n_hiddens + 1]   # (A, 1)

    x = x_ref[...]                                                              # (S_pad, TB)

    # fc1 + ReLU (MXU, f32 accumulation; zero-padded feature rows contribute 0).
    h = jnp.maximum(jnp.dot(w1, x, preferred_element_type=jnp.float32) + b1, 0.0)   # (H, TB)

    # fc2 + 2*tanh (tanh on the EUP). Lane-dense (A, TB) output tile.
    # TODO(synk): for n_actions==1 a VPU broadcast-mul + XLU sublane reduction could
    # replace this tiny (1, H) MXU matmul; left on MXU (not the bottleneck here).
    y = jnp.dot(w2, h, preferred_element_type=jnp.float32) + b2                     # (A, TB)
    o_ref[...] = (2.0 * jnp.tanh(y)).astype(o_ref.dtype)


# ----------------------------------------------------------------------------- packing
def pack_params(w1, b1, w2, b2):
    """Pack PyTorch-layout params (W:(out,in), b:(out,)) into one 128-lane slab.

    Call ONCE per set of weights (not per forward call)."""
    n_hiddens, n_states = w1.shape
    n_actions = w2.shape[0]
    s_pad = _round_up(n_states, SUBLANE)
    # Slab layout assumes the small-MLP regime (true for Pendulum: 3 -> 32 -> 1).
    assert s_pad + 1 <= LANE and n_hiddens + 1 <= LANE, "layer dims too large for 128-lane slab"
    rows = _round_up(n_hiddens + n_actions, SUBLANE)
    p = jnp.zeros((rows, LANE), jnp.float32)
    p = p.at[:n_hiddens, :n_states].set(w1.astype(jnp.float32))
    p = p.at[:n_hiddens, s_pad].set(b1.astype(jnp.float32))
    p = p.at[n_hiddens:n_hiddens + n_actions, :n_hiddens].set(w2.astype(jnp.float32))
    p = p.at[n_hiddens:n_hiddens + n_actions, n_hiddens].set(b2.astype(jnp.float32))
    return p


# ----------------------------------------------------------------------------- forward
def _choose_tb(batch, block_b):
    b_lane = _round_up(batch, LANE)
    tb = _round_up(min(block_b, b_lane), LANE)
    # Once the batch spans >= 2 lane-tiles, keep at least 2 grid steps so the
    # "parallel" axis can shard tiles across both TensorCores on v7x.
    if b_lane >= 2 * LANE:
        tb = min(tb, _round_up((b_lane + 1) // 2, LANE))
    return tb


def _forward_impl(x, params, *, n_states, n_hiddens, n_actions, block_b):
    B = x.shape[0]
    s_pad = _round_up(n_states, SUBLANE)

    tb = _choose_tb(B, block_b)
    b_pad = _round_up(B, tb)

    # Feature-major activations: batch on the 128-lane axis. Single fused pad
    # (feature dim to s_pad, batch dim to b_pad) — no zeros+scatter round trip.
    x_t = jnp.pad(x.astype(jnp.float32).T, ((0, s_pad - n_states), (0, b_pad - B)))

    out_t = pl.pallas_call(
        functools.partial(policy_net_kernel, s_pad=s_pad,
                          n_hiddens=n_hiddens, n_actions=n_actions),
        out_shape=jax.ShapeDtypeStruct((n_actions, b_pad), jnp.float32),
        grid_spec=pltpu.PrefetchScalarGridSpec(
            num_scalar_prefetch=0,
            grid=(b_pad // tb,),
            in_specs=[
                # Single packed param slab, constant index map -> one DMA,
                # VMEM-resident across all batch tiles.
                pl.BlockSpec(params.shape, lambda i: (0, 0)),
                # Batch-tiled feature-major input (lane dim = tb, multiple of 128).
                pl.BlockSpec((s_pad, tb), lambda i: (0, i)),
            ],
            out_specs=pl.BlockSpec((n_actions, tb), lambda i: (0, i)),
        ),
        compiler_params=pltpu.CompilerParams(
            dimension_semantics=("parallel",)),
    )(params, x_t)

    # Drop zero-padded batch lanes, return batch-major like the PyTorch module.
    return out_t[:, :B].T


class PolicyNetPallas:
    """Packs the weights once; __call__(x) runs the jitted Pallas forward."""

    def __init__(self, w1, b1, w2, b2, *, block_b=8192):
        self.n_hiddens, self.n_states = w1.shape
        self.n_actions = w2.shape[0]
        self.params = pack_params(w1, b1, w2, b2)   # packed ONCE, reused every call
        self._fwd = jax.jit(functools.partial(
            _forward_impl,
            n_states=self.n_states, n_hiddens=self.n_hiddens,
            n_actions=self.n_actions, block_b=block_b))

    def __call__(self, x):
        return self._fwd(x, self.params)


# ----------------------------------------------------------------------------- reference / init
def init_params(key, n_states, n_hiddens, n_actions):
    """Deterministic PyTorch-Linear-style init, weights in torch (out, in) layout."""
    k1, k2, k3, k4 = jax.random.split(key, 4)
    bound1 = 1.0 / jnp.sqrt(jnp.float32(n_states))
    bound2 = 1.0 / jnp.sqrt(jnp.float32(n_hiddens))
    w1 = jax.random.uniform(k1, (n_hiddens, n_states), jnp.float32, -bound1, bound1)
    b1 = jax.random.uniform(k2, (n_hiddens,), jnp.float32, -bound1, bound1)
    w2 = jax.random.uniform(k3, (n_actions, n_hiddens), jnp.float32, -bound2, bound2)
    b2 = jax.random.uniform(k4, (n_actions,), jnp.float32, -bound2, bound2)
    return w1, b1, w2, b2


def reference_forward(x, w1, b1, w2, b2):
    h = jnp.maximum(x @ w1.T + b1, 0.0)
    return 2.0 * jnp.tanh(h @ w2.T + b2)


if __name__ == "__main__":
    # Pendulum-v1 actor: n_states = 3, n_actions = 1, small hidden layer.
    n_states, n_hiddens, n_actions = 3, 32, 1

    key = jax.random.PRNGKey(0)
    kx, kp, kx2 = jax.random.split(key, 3)
    w1, b1, w2, b2 = init_params(kp, n_states, n_hiddens, n_actions)

    net = PolicyNetPallas(w1, b1, w2, b2)   # parameter packing happens once, here

    # Small per-env-step batch (single 128-lane tile).
    x = jax.random.normal(kx, (8, n_states), jnp.float32)
    out = jax.block_until_ready(net(x))
    ref = reference_forward(x, w1, b1, w2, b2)
    assert out.shape == (8, n_actions)
    assert jnp.allclose(out, ref, atol=1e-5, rtol=1e-5), "mismatch vs reference (B=8)"

    # Larger, non-tile-multiple batch: exercises the padded 2-tile grid path
    # (2 x 256-lane tiles -> both TensorCores get work on v7x).
    x2 = jax.random.normal(kx2, (300, n_states), jnp.float32)
    out2 = jax.block_until_ready(net(x2))
    ref2 = reference_forward(x2, w1, b1, w2, b2)
    assert out2.shape == (300, n_actions)
    assert jnp.allclose(out2, ref2, atol=1e-5, rtol=1e-5), "mismatch vs reference (B=300)"

    print("KERNEL_OK")
</pallas_src>

<mosaic_0001>
module attributes {stable_mosaic.version = 11 : i64} {
  func.func @policy_net_kernel(%arg0: i32, %arg1: memref<40x128xf32, #tpu.memory_space<vmem>>, %arg2: memref<8x128xf32, #tpu.memory_space<vmem>>, %arg3: memref<1x128xf32, #tpu.memory_space<vmem>>) attributes {dimension_semantics = [#tpu.dimension_semantics<parallel>], iteration_bounds = array<i64: 1>, scalar_prefetch = 0 : i64, scratch_operands = 0 : i64, tpu.core_type = #tpu.core_type<tc>, window_params = [{pipeline_mode = #tpu.pipeline_mode<synchronous>, transform_indices = @transform_0, window_bounds = array<i64: 40, 128>}, {transform_indices = @transform_1, window_bounds = array<i64: 8, 128>}, {transform_indices = @transform_2, window_bounds = array<i64: 1, 128>}]} {
    %c0 = arith.constant 0 : index
    %c0_0 = arith.constant 0 : index
    %0 = vector.load %arg1[%c0, %c0_0] : memref<40x128xf32, #tpu.memory_space<vmem>>, vector<32x8xf32>
    %c0_1 = arith.constant 0 : index
    %c8 = arith.constant 8 : index
    %1 = vector.load %arg1[%c0_1, %c8] : memref<40x128xf32, #tpu.memory_space<vmem>>, vector<32x1xf32>
    %c32 = arith.constant 32 : index
    %c0_2 = arith.constant 0 : index
    %2 = vector.load %arg1[%c32, %c0_2] : memref<40x128xf32, #tpu.memory_space<vmem>>, vector<1x32xf32>
    %c32_3 = arith.constant 32 : index
    %c32_4 = arith.constant 32 : index
    %3 = vector.load %arg1[%c32_3, %c32_4] : memref<40x128xf32, #tpu.memory_space<vmem>>, vector<1x1xf32>
    %c0_5 = arith.constant 0 : index
    %c0_6 = arith.constant 0 : index
    %4 = vector.load %arg2[%c0_5, %c0_6] : memref<8x128xf32, #tpu.memory_space<vmem>>, vector<8x128xf32>
    %cst = arith.constant dense<0.000000e+00> : vector<32x128xf32>
    %5 = tpu.matmul %0, %4, %cst {dimension_numbers = #tpu.dot_dimension_numbers<[1], [0], [0], [1], [0, 0, 1, 1], [], []>} : vector<32x8xf32>, vector<8x128xf32>, vector<32x128xf32> -> vector<32x128xf32>
    %6 = vector.broadcast %1 : vector<32x1xf32> to vector<32x128xf32>
    %7 = arith.addf %5, %6 : vector<32x128xf32>
    %cst_7 = arith.constant 0.000000e+00 : f32
    %8 = vector.broadcast %cst_7 : f32 to vector<32x128xf32>
    %9 = arith.maximumf %7, %8 : vector<32x128xf32>
    %cst_8 = arith.constant dense<0.000000e+00> : vector<1x128xf32>
    %10 = tpu.matmul %2, %9, %cst_8 {dimension_numbers = #tpu.dot_dimension_numbers<[1], [0], [0], [1], [0, 0, 1, 1], [], []>} : vector<1x32xf32>, vector<32x128xf32>, vector<1x128xf32> -> vector<1x128xf32>
    %11 = vector.broadcast %3 : vector<1x1xf32> to vector<1x128xf32>
    %12 = arith.addf %10, %11 : vector<1x128xf32>
    %13 = math.tanh %12 : vector<1x128xf32>
    %cst_9 = arith.constant 2.000000e+00 : f32
    %14 = vector.broadcast %cst_9 : f32 to vector<1x128xf32>
    %15 = arith.mulf %14, %13 : vector<1x128xf32>
    %c0_10 = arith.constant 0 : index
    %c0_11 = arith.constant 0 : index
    %16 = vector.load %arg3[%c0_10, %c0_11] : memref<1x128xf32, #tpu.memory_space<vmem>>, vector<1x128xf32>
    tpu.vector_store %arg3[%c0_10, %c0_11], %15 {strides = array<i32>} : memref<1x128xf32, #tpu.memory_space<vmem>>, vector<1x128xf32>,
    return
  }
  func.func @transform_0(%arg0: i32) -> (i32, i32) {
    %c0_i32 = arith.constant 0 : i32
    %c0_i32_0 = arith.constant 0 : i32
    %c0_i32_1 = arith.constant 0 : i32
    return %c0_i32, %c0_i32_0 : i32, i32
  }
  func.func @transform_1(%arg0: i32) -> (i32, i32) {
    %c0_i32 = arith.constant 0 : i32
    %c0_i32_0 = arith.constant 0 : i32
    return %c0_i32, %arg0 : i32, i32
  }
  func.func @transform_2(%arg0: i32) -> (i32, i32) {
    %c0_i32 = arith.constant 0 : i32
    %c0_i32_0 = arith.constant 0 : i32
    return %c0_i32, %arg0 : i32, i32
  }
}

</mosaic_0001>

<llo_original>
// kernel: _forward_impl.1
$region0: #{_forward_impl.1}
  #allocation0 [shape = 'u32[]', space=smem, size = 0x4, offset = 0x4, fixed_abs, tag = 'smem constant byte address 0x4 - core index']
  #allocation1 [shape = 'u32[144,128]{1,0:T(1,128)}', space=vmem, size = 0x12000, scoped, tag = 'internal scratch']
  %s0 = inlined_call_operand.hbm [shape: f32[40,128], index: 0, kind: input, shape index: {}]
  %s1 = inlined_call_operand.vmem [shape: f32[8,128], index: 1, kind: input, shape index: {}]
  %s2 = inlined_call_operand.vmem [shape: f32[1,128], index: 2, kind: output, shape index: {}]
  %s3 = sld [smem:[#allocation0]]
  $region22: #{_forward_impl.1} parent=0
    _
  %s5 = ssub.s32 1, %s3
  %s6 = scalar_select 0, %s5, %s3
  $region1: #{_forward_impl.1} parent=0
    #allocation2 [shape = 'u8[20480]{0}', space=vmem, size = 0x5000, scoped, tag = 'input window, operand 0, single buffered']
    #allocation3 [shape = 's32[1]{0}', space=sflag, size = 0x4, scoped, tag = 'scoped memory for _forward_impl.1']
    %7 = vsyncpa [#allocation3], 0
    // Predicated region
    $region2: #{_forward_impl.1} parent=1 // pred_check
      _
    $region3: #{_forward_impl.1} parent=1 // pred_check_branch
      %9 = sbr.rel (0) target = $region5
    $region4: #{_forward_impl.1} parent=1 // pred_region
      %s11 = ssub.s32 640, 640
      %12 = vsyncadd [#allocation3], %s11
      %s13 = sshll.u32 [#allocation2], 4
      %s14 = int_to_ptr.vmem [resolvable:$true] %s13
      %19 = dma.hbm_to_vmem [thread:$0]  %s0, 640, %s14, [#allocation3], 128, 128, 8
    $region5: #{_forward_impl.1} parent=1 // pred_fallthru
      _
    // Predicated region
    $region6: #{_forward_impl.1} parent=1 // pred_check
      _
    $region7: #{_forward_impl.1} parent=1 // pred_check_branch
      %21 = sbr.rel (0) target = $region9
    $region8: #{_forward_impl.1} parent=1 // pred_region
      _
    $region9: #{_forward_impl.1} parent=1 // pred_fallthru
      _
    // Predicated region
    $region10: #{_forward_impl.1} parent=1 // pred_check
      _
    $region11: #{_forward_impl.1} parent=1 // pred_check_branch
      %23 = sbr.rel (0) target = $region13
    $region12: #{_forward_impl.1} parent=1 // pred_region
      %24 = dma.done [#allocation3], 640
    $region13: #{_forward_impl.1} parent=1 // pred_fallthru
      _
    %v25 = vld [vmem:[#allocation2] sm:$0xff]
    %v26 = vld [vmem:[#allocation2 + $0x8] sm:$0xff]
    %v27 = vld [vmem:[#allocation2 + $0x10] sm:$0xff]
    %v28 = vld [vmem:[#allocation2 + $0x18] sm:$0xff]
    %v29 = vld [vmem:[#allocation2 + $0x20] sm:$0x1]
    %v30 = vld [vmem:[%s1] sm:$0xff]
    %32 = vset.pattern.permute.xlu0 8
    %33 = vperm.xlu0 %32, %v25
    %v34 = vpop.permute.xlu0 %33
    %37 = vset.pattern.permute.xlu0 8
    %38 = vperm.xlu0 %37, %v26
    %v39 = vpop.permute.xlu0 %38
    %42 = vset.pattern.permute.xlu0 8
    %43 = vperm.xlu0 %42, %v27
    %v44 = vpop.permute.xlu0 %43
    %47 = vset.pattern.permute.xlu0 8
    %48 = vperm.xlu0 %47, %v28
    %v49 = vpop.permute.xlu0 %48
    %vm51 = vcmask 64512
    %v52 = vsel %vm51, %v25, 0
    %v54 = vsel %vm51, %v26, 0
    %v56 = vsel %vm51, %v27, 0
    %v58 = vsel %vm51, %v28, 0
    %60 = vmatprep.subr.mxu0 0.0
    %61 = vmatpush1.msra.mxu0 %v30
    %62 = vmatprep.subr.mxu0 0.0
    %63 = vmatpush1.msra.mxu0 0.0
    %64 = vmatprep.subr.mxu0 0.0
    %65 = vmatpush1.msra.mxu0 0.0
    %66 = vmatprep.subr.mxu0 0.0
    %67 = vmatpush1.msra.mxu0 0.0
    %68 = vmatprep.subr.mxu0 0.0
    %69 = vmatpush1.msra.mxu0 0.0
    %70 = vmatprep.subr.mxu0 0.0
    %71 = vmatpush1.msra.mxu0 0.0
    %72 = vmatprep.subr.mxu0 0.0
    %73 = vmatpush1.msra.mxu0 0.0
    %74 = vmatprep.subr.mxu0 0.0
    %75 = vmatpush1.msra.mxu0 0.0
    %76 = vmatprep.subr.mxu0 0.0
    %77 = vmatpush1.msra.mxu0 0.0
    %78 = vmatprep.subr.mxu0 0.0
    %79 = vmatpush1.msra.mxu0 0.0
    %80 = vmatprep.subr.mxu0 0.0
    %81 = vmatpush1.msra.mxu0 0.0
    %82 = vmatprep.subr.mxu0 0.0
    %83 = vmatpush1.msra.mxu0 0.0
    %84 = vmatprep.subr.mxu0 0.0
    %85 = vmatpush1.msra.mxu0 0.0
    %86 = vmatprep.subr.mxu0 0.0
    %87 = vmatpush1.msra.mxu0 0.0
    %88 = vmatprep.subr.mxu0 0.0
    %89 = vmatpush1.msra.mxu0 0.0
    %90 = vmatprep.subr.mxu0 0.0
    %91 = vmatpush1.msra.mxu0 0.0
    %92 = vmatprep.subr.mxu0 0.0
    %93 = vmatpush1.msra.mxu0 0.0
    %94 = vmatprep.subr.mxu0 0.0
    %95 = vmatpush1.msra.mxu0 0.0
    %96 = vmatprep.subr.mxu0 0.0
    %97 = vmatpush1.msra.mxu0 0.0
    %98 = vmatprep.subr.mxu0 0.0
    %99 = vmatpush1.msra.mxu0 0.0
    %100 = vmatprep.subr.mxu0 0.0
    %101 = vmatpush1.msra.mxu0 0.0
    %102 = vmatprep.subr.mxu0 0.0
    %103 = vmatpush1.msra.mxu0 0.0
    %104 = vmatprep.subr.mxu0 0.0
    %105 = vmatpush1.msra.mxu0 0.0
    %106 = vmatprep.subr.mxu0 0.0
    %107 = vmatpush1.msra.mxu0 0.0
    %108 = vmatprep.subr.mxu0 0.0
    %109 = vmatpush1.msra.mxu0 0.0
    %110 = vmatprep.subr.mxu0 0.0
    %111 = vmatpush1.msra.mxu0 0.0
    %112 = vmatprep.subr.mxu0 0.0
    %113 = vmatpush1.msra.mxu0 0.0
    %114 = vmatprep.subr.mxu0 0.0
    %115 = vmatpush1.msra.mxu0 0.0
    %116 = vmatprep.subr.mxu0 0.0
    %117 = vmatpush1.msra.mxu0 0.0
    %118 = vmatprep.subr.mxu0 0.0
    %119 = vmatpush1.msra.mxu0 0.0
    %120 = vmatprep.subr.mxu0 0.0
    %121 = vmatpush1.msra.mxu0 0.0
    %122 = vmatprep.subr.mxu0 0.0
    %123 = vmatpush1.msra.mxu0 0.0
    %124 = vmatprep.mubr.f32.mxu0 0.0
    %125 = vmatmul.mubr.f32.gmra.mrb[0].mxu0 %v52
    %v126 = vpop.f32.mrb[0].mxu0
    %v127 = vadd.f32 %v34, %v126
    %v128 = vpop.f32.mrb[0].mxu0
    %129 = vmatprep.mubr.f32.mxu0 0.0
    %130 = vmatmul.mubr.f32.gmra.mrb[0].mxu0 %v54
    %v131 = vpop.f32.mrb[0].mxu0
    %v132 = vadd.f32 %v39, %v131
    %v133 = vpop.f32.mrb[0].mxu0
    %134 = vmatprep.mubr.f32.mxu0 0.0
    %135 = vmatmul.mubr.f32.gmra.mrb[0].mxu0 %v56
    %v136 = vpop.f32.mrb[0].mxu0
    %v137 = vadd.f32 %v44, %v136
    %v138 = vpop.f32.mrb[0].mxu0
    %139 = vmatprep.mubr.f32.mxu0 0.0
    %140 = vmatmul.mubr.f32.gmra.mrb[0].mxu0 %v58
    %v141 = vpop.f32.mrb[0].mxu0
    %v142 = vadd.f32 %v49, %v141
    %v143 = vpop.f32.mrb[0].mxu0
    %144 = vdwg.mxu0
    %v145 = vmax.f32 %v127, 0.0
    %v146 = vmax.f32 %v132, 0.0
    %v147 = vmax.f32 %v137, 0.0
    %v148 = vmax.f32 %v142, 0.0
    %150 = vset.pattern.permute.xlu0 32
    %151 = vperm.xlu0 %150, %v29
    %v152 = vpop.permute.xlu0 %151
    %vm154 = vcmask 261120
    %v155 = vsel %vm154, %v29, 0
    %157 = vmatprep.subr.mxu0 0.0
    %158 = vmatpush1.msra.mxu0 %v145
    %159 = vmatprep.subr.mxu0 0.0
    %160 = vmatpush1.msra.mxu0 %v146
    %161 = vmatprep.subr.mxu0 0.0
    %162 = vmatpush1.msra.mxu0 %v147
    %163 = vmatprep.subr.mxu0 0.0
    %164 = vmatpush1.msra.mxu0 %v148
    %165 = vmatprep.subr.mxu0 0.0
    %166 = vmatpush1.msra.mxu0 0.0
    %167 = vmatprep.subr.mxu0 0.0
    %168 = vmatpush1.msra.mxu0 0.0
    %169 = vmatprep.subr.mxu0 0.0
    %170 = vmatpush1.msra.mxu0 0.0
    %171 = vmatprep.subr.mxu0 0.0
    %172 = vmatpush1.msra.mxu0 0.0
    %173 = vmatprep.subr.mxu0 0.0
    %174 = vmatpush1.msra.mxu0 0.0
    %175 = vmatprep.subr.mxu0 0.0
    %176 = vmatpush1.msra.mxu0 0.0
    %177 = vmatprep.subr.mxu0 0.0
    %178 = vmatpush1.msra.mxu0 0.0
    %179 = vmatprep.subr.mxu0 0.0
    %180 = vmatpush1.msra.mxu0 0.0
    %181 = vmatprep.subr.mxu0 0.0
    %182 = vmatpush1.msra.mxu0 0.0
    %183 = vmatprep.subr.mxu0 0.0
    %184 = vmatpush1.msra.mxu0 0.0
    %185 = vmatprep.subr.mxu0 0.0
    %186 = vmatpush1.msra.mxu0 0.0
    %187 = vmatprep.subr.mxu0 0.0
    %188 = vmatpush1.msra.mxu0 0.0
    %189 = vmatprep.subr.mxu0 0.0
    %190 = vmatpush1.msra.mxu0 0.0
    %191 = vmatprep.subr.mxu0 0.0
    %192 = vmatpush1.msra.mxu0 0.0
    %193 = vmatprep.subr.mxu0 0.0
    %194 = vmatpush1.msra.mxu0 0.0
    %195 = vmatprep.subr.mxu0 0.0
    %196 = vmatpush1.msra.mxu0 0.0
    %197 = vmatprep.subr.mxu0 0.0
    %198 = vmatpush1.msra.mxu0 0.0
    %199 = vmatprep.subr.mxu0 0.0
    %200 = vmatpush1.msra.mxu0 0.0
    %201 = vmatprep.subr.mxu0 0.0
    %202 = vmatpush1.msra.mxu0 0.0
    %203 = vmatprep.subr.mxu0 0.0
    %204 = vmatpush1.msra.mxu0 0.0
    %205 = vmatprep.subr.mxu0 0.0
    %206 = vmatpush1.msra.mxu0 0.0
    %207 = vmatprep.subr.mxu0 0.0
    %208 = vmatpush1.msra.mxu0 0.0
    %209 = vmatprep.subr.mxu0 0.0
    %210 = vmatpush1.msra.mxu0 0.0
    %211 = vmatprep.subr.mxu0 0.0
    %212 = vmatpush1.msra.mxu0 0.0
    %213 = vmatprep.subr.mxu0 0.0
    %214 = vmatpush1.msra.mxu0 0.0
    %215 = vmatprep.subr.mxu0 0.0
    %216 = vmatpush1.msra.mxu0 0.0
    %217 = vmatprep.subr.mxu0 0.0
    %218 = vmatpush1.msra.mxu0 0.0
    %219 = vmatprep.subr.mxu0 0.0
    %220 = vmatpush1.msra.mxu0 0.0
    %221 = vmatprep.mubr.f32.mxu0 0.0
    %222 = vmatmul.mubr.f32.gmra.mrb[0].mxu0 %v155
    %v223 = vpop.f32.mrb[0].mxu0
    %v224 = vadd.f32 %v152, %v223
    %v225 = vpop.f32.mrb[0].mxu0
    %226 = vdwg.mxu0
    %v227 = vtanh.pop %v224
    %v228 = vmul.f32 %v227, 2.0
    %229 = vst [vmem:[%s2] sm:$0x1] %v228
    // Predicated region
    $region14: #{_forward_impl.1} parent=1 // pred_check
      _
    $region15: #{_forward_impl.1} parent=1 // pred_check_branch
      %231 = sbr.rel (0) target = $region17
    $region16: #{_forward_impl.1} parent=1 // pred_region
      _
    $region17: #{_forward_impl.1} parent=1 // pred_fallthru
      _
    // Predicated region
    $region18: #{_forward_impl.1} parent=1 // pred_check
      _
    $region19: #{_forward_impl.1} parent=1 // pred_check_branch
      %233 = sbr.rel (0) target = $region21
    $region20: #{_forward_impl.1} parent=1 // pred_region
      _
    $region21: #{_forward_impl.1} parent=1 // pred_fallthru
      _
    %234 = vsyncpa [#allocation3], 1

</llo_original>
